<compile_context>
chip_gen: v5e
topology: v5e:2x2
jax: 0.10.0
libtpu: 0.0.40
codegen_flags: <defaults>
</compile_context>

<pallas_src>
import functools

import jax
import jax.numpy as jnp
from jax import lax
from jax.experimental import pallas as pl
from jax.experimental.pallas import tpu as pltpu


# -----------------------------------------------------------------------------
# Hardware feature / budget detection (done once, outside the kernels).
# -----------------------------------------------------------------------------
@functools.lru_cache(maxsize=None)
def _tpu_info():
    """Return (vmem_capacity_bytes, eup_supports_bf16)."""
    vmem_cap = 64 * 1024 * 1024            # conservative default (v7x per-TC size)
    try:
        vmem_cap = int(pltpu.get_tpu_info().vmem_capacity_bytes)
    except Exception:                       # info query only; never hides kernel bugs
        pass
    kind = ""
    try:
        kind = jax.devices()[0].device_kind.lower()
    except Exception:
        pass
    # v6e / v7x EUP handle bf16 transcendentals; v5e and older do not (bf16 math
    # there would only add pack/unpack casts), so default to f32 exp when unsure.
    old_gen = any(t in kind for t in ("v2", "v3", "v4", "v5"))
    eup_bf16 = (not old_gen) and any(t in kind for t in ("v6", "v7"))
    return vmem_cap, eup_bf16


@functools.lru_cache(maxsize=None)
def _single_buffer_supported():
    """Feature-detect pipeline_mode=pl.Buffered(1) once with a tiny probe kernel,
    instead of wrapping the real attention kernels in a broad try/except."""
    def _probe(x_ref, o_ref):
        o_ref[...] = x_ref[...]
    try:
        fn = pl.pallas_call(
            _probe,
            out_shape=jax.ShapeDtypeStruct((8, 128), jnp.float32),
            grid=(1,),
            in_specs=[pl.BlockSpec((8, 128), lambda i: (0, 0),
                                   pipeline_mode=pl.Buffered(1))],
            out_specs=pl.BlockSpec((8, 128), lambda i: (0, 0)),
        )
        jax.block_until_ready(fn(jnp.zeros((8, 128), jnp.float32)))
        return True
    except Exception:   # probe-only guard: fall back to default double-buffering
        return False


# -----------------------------------------------------------------------------
# Kernel 1: fused K|V projection, written out head-major in bf16.
#   K: (B, H, N, hd)     V: (B, H, N, hd+1) with the last column == 1.0
# The ones column lets kernel 2 obtain sum(p, axis=-1) as an extra (free) output
# column of the PV matmul on the MXU instead of an XLU cross-lane reduction.
# -----------------------------------------------------------------------------
def kv_proj_kernel(x_ref, wkv_ref, k_ref, v_ref, *, num_heads):
    # x_ref  : (1, tn, C)   bf16 input tile
    # wkv_ref: (C, 2C)      bf16 fused [K | V] projection weight
    # k_ref  : (1, H, tn, hd)    head-major K output (bf16)
    # v_ref  : (1, H, tn, hd+1)  head-major V output + trailing ones column (bf16)
    x = x_ref[0].astype(jnp.bfloat16)                                 # (tn, C)
    kv = jnp.dot(x, wkv_ref[...], preferred_element_type=jnp.float32)  # (tn, 2C) f32
    tn, c2 = kv.shape
    c = c2 // 2
    hd = c // num_heads
    ones_col = jnp.ones((tn, 1), dtype=v_ref.dtype)
    for h in range(num_heads):
        k_ref[0, h] = kv[:, h * hd:(h + 1) * hd].astype(k_ref.dtype)
        vh = kv[:, c + h * hd:c + (h + 1) * hd].astype(v_ref.dtype)
        v_ref[0, h] = jnp.concatenate([vh, ones_col], axis=-1)


# -----------------------------------------------------------------------------
# Kernel 2: flash attention (online softmax) fused with the Q projection and the
# output projection.  grid = (B, N//tq, N//tkv); kv axis innermost, "arbitrary".
# -----------------------------------------------------------------------------
def flash_attn_kernel(xq_ref, k_ref, v_ref, wq_ref, wproj_ref, bproj_ref, o_ref,
                      q_scr, m_scr, l_scr, acc_scr, merged_scr,
                      *, num_heads, exp_in_bf16, approx_recip):
    ki = pl.program_id(2)
    hd = q_scr.shape[-1]

    @pl.when(ki == 0)
    def _init():
        # Project this Q tile once (1/sqrt(hd) is folded into wq), cache it
        # head-major in bf16, and reset the online-softmax state.
        xq = xq_ref[0].astype(jnp.bfloat16)                           # (tq, C)
        q = jnp.dot(xq, wq_ref[...], preferred_element_type=jnp.float32)
        for h in range(num_heads):
            q_scr[h] = q[:, h * hd:(h + 1) * hd].astype(q_scr.dtype)
        m_scr[...] = jnp.full_like(m_scr, -jnp.inf)
        l_scr[...] = jnp.zeros_like(l_scr)
        acc_scr[...] = jnp.zeros_like(acc_scr)

    q = q_scr[...]                                                    # (H, tq, hd)   bf16
    k = k_ref[0]                                                      # (H, tkv, hd)  bf16
    v_aug = v_ref[0]                                                  # (H, tkv, hd+1) bf16

    # Batched-over-heads MXU matmul: s[h,i,j] = q[h,i,:] . k[h,j,:]
    s = lax.dot_general(q, k, (((2,), (2,)), ((0,), (0,))),
                        preferred_element_type=jnp.float32)           # (H, tq, tkv) f32

    # Online softmax update (statistics / accumulator in f32).
    m_prev = m_scr[...]                                               # (H, tq, 1)
    m_new = jnp.maximum(m_prev, jnp.max(s, axis=-1, keepdims=True))
    alpha = jnp.exp(m_prev - m_new)                                   # (H, tq, 1) f32
    if exp_in_bf16:
        # v6e/v7x: bf16 EUP roughly doubles exp throughput on the binding unit.
        p = jnp.exp((s - m_new).astype(jnp.bfloat16))                 # (H, tq, tkv) bf16
    else:
        # v5e: no bf16 EUP -> keep the exp in f32, cast only for the MXU.
        p = jnp.exp(s - m_new).astype(jnp.bfloat16)

    # PV matmul against V augmented with a ones column: the last output column
    # is exactly sum(p, axis=-1), so no separate XLU reduction is needed.
    pv = lax.dot_general(p, v_aug, (((2,), (1,)), ((0,), (0,))),
                         preferred_element_type=jnp.float32)          # (H, tq, hd+1) f32
    l_scr[...] = alpha * l_scr[...] + pv[:, :, hd:]
    acc_scr[...] = alpha * acc_scr[...] + pv[:, :, :hd]
    m_scr[...] = m_new

    @pl.when(ki == pl.num_programs(2) - 1)
    def _finalize():
        # Normalize, scatter heads (cast per head, bf16 slab keeps the epilogue
        # store-light), then fused output projection + bias.
        l = l_scr[...]
        if approx_recip:
            # EUP approximate reciprocal: deliberate ~1e-3-level accuracy trade.
            inv_l = pl.reciprocal(l, approx=True)
        else:
            inv_l = 1.0 / l
        ctx = acc_scr[...] * inv_l                                    # (H, tq, hd) f32
        for h in range(num_heads):
            merged_scr[:, h * hd:(h + 1) * hd] = ctx[h].astype(merged_scr.dtype)
        out = jnp.dot(merged_scr[...], wproj_ref[...],
                      preferred_element_type=jnp.float32)             # (tq, C) f32
        o_ref[0] = (out + bproj_ref[...]).astype(o_ref.dtype)


# -----------------------------------------------------------------------------
# Wrappers
# -----------------------------------------------------------------------------
def _pick_tile(n, candidates):
    """Largest candidate tile that evenly divides n (falls back to n itself)."""
    for t in candidates:
        if t <= n and n % t == 0:
            return t
    return n


def _const_spec(shape, single_buffer):
    """BlockSpec for a grid-invariant (weight/bias) operand."""
    index_map = lambda *_: (0,) * len(shape)
    if single_buffer:
        # Grid-invariant operands don't need the default 2x pipelining buffers.
        return pl.BlockSpec(shape, index_map, pipeline_mode=pl.Buffered(1))
    return pl.BlockSpec(shape, index_map)


def _attention_pallas(x_bf, wq, wkv, wproj, bproj, num_heads, out_dtype,
                      *, approx_recip=True):
    B, N, C = x_bf.shape
    H = num_heads
    hd = C // H

    vmem_cap, eup_bf16 = _tpu_info()
    single_buffer = _single_buffer_supported()

    # Generation-aware VMEM budget: ~3/4 of physical, capped (64 MiB/TC on v7x,
    # 128 MiB on v5e/v6e), never below the 32 MiB default.
    vmem_limit = max(32 * 1024 * 1024,
                     min(int(vmem_cap * 3 // 4), 100 * 1024 * 1024))

    # MXU-friendly tiles.  tkv up to 512 on 128-MiB parts, 256 on v7x (64 MiB/TC);
    # tq up to 256 everywhere.
    max_tkv = 512 if vmem_cap > 64 * 1024 * 1024 else 256
    tn = _pick_tile(N, (256, 128, 64, 32, 16, 8))
    tq = _pick_tile(N, (256, 128, 64, 32, 16, 8))
    tkv = _pick_tile(N, tuple(t for t in (512, 256, 128, 64, 32, 16, 8)
                              if t <= max_tkv))

    # Keep >= 2 cells on the parallel grid axes so v7x's two TensorCores both get
    # work (megacore sharding happens along "parallel" axes).
    if B * (N // tq) < 2:
        for t in (128, 64, 32, 16, 8):
            if t < tq and N % t == 0:
                tq = t
                break

    # Rough kernel-2 VMEM footprint; shrink tkv then tq if over budget so the
    # larger tiles never push past the per-generation VMEM ceiling.
    out_isize = jnp.dtype(out_dtype).itemsize

    def _est(tq_, tkv_):
        bf2, f4 = 2, 4
        kv_blocks = 2 * 2 * H * tkv_ * (hd + 1) * bf2        # K,V tiles, double-buffered
        io_blocks = 2 * tq_ * C * (bf2 + out_isize)          # x tile + out tile
        weights = 2 * C * C * bf2 + C * f4                   # wq + wproj + bias
        scratch = (H * tq_ * hd * (bf2 + f4)                 # q cache + f32 acc
                   + 2 * H * tq_ * 128 * f4                  # m/l (lane dim pads to 128)
                   + tq_ * C * bf2)                          # merged-heads slab
        s_and_p = 2 * H * tq_ * tkv_ * f4                    # score / prob temporaries
        return kv_blocks + io_blocks + weights + scratch + s_and_p

    budget = int(0.6 * vmem_limit)
    while _est(tq, tkv) > budget and tkv > 128 and N % (tkv // 2) == 0:
        tkv //= 2
    while _est(tq, tkv) > budget and tq > 128 and N % (tq // 2) == 0:
        tq //= 2

    # --- Kernel 1: fused K|V projection into head-major bf16 ------------------
    k_hm, v_hm = pl.pallas_call(
        functools.partial(kv_proj_kernel, num_heads=H),
        out_shape=(jax.ShapeDtypeStruct((B, H, N, hd), jnp.bfloat16),
                   jax.ShapeDtypeStruct((B, H, N, hd + 1), jnp.bfloat16)),
        grid=(B, N // tn),
        in_specs=[
            pl.BlockSpec((1, tn, C), lambda b, i: (b, i, 0)),
            _const_spec((C, 2 * C), single_buffer),
        ],
        out_specs=(
            pl.BlockSpec((1, H, tn, hd), lambda b, i: (b, 0, i, 0)),
            pl.BlockSpec((1, H, tn, hd + 1), lambda b, i: (b, 0, i, 0)),
        ),
        compiler_params=pltpu.CompilerParams(
            dimension_semantics=("parallel", "parallel"),
            vmem_limit_bytes=vmem_limit),
    )(x_bf, wkv)

    # --- Kernel 2: flash attention + fused Q / output projections -------------
    out = pl.pallas_call(
        functools.partial(flash_attn_kernel, num_heads=H,
                          exp_in_bf16=eup_bf16, approx_recip=approx_recip),
        out_shape=jax.ShapeDtypeStruct((B, N, C), out_dtype),
        grid=(B, N // tq, N // tkv),
        in_specs=[
            pl.BlockSpec((1, tq, C), lambda b, qi, ki: (b, qi, 0)),
            pl.BlockSpec((1, H, tkv, hd), lambda b, qi, ki: (b, 0, ki, 0)),
            pl.BlockSpec((1, H, tkv, hd + 1), lambda b, qi, ki: (b, 0, ki, 0)),
            _const_spec((C, C), single_buffer),
            _const_spec((C, C), single_buffer),
            _const_spec((1, C), single_buffer),
        ],
        out_specs=pl.BlockSpec((1, tq, C), lambda b, qi, ki: (b, qi, 0)),
        scratch_shapes=[
            pltpu.VMEM((H, tq, hd), jnp.bfloat16),   # cached projected Q tile
            pltpu.VMEM((H, tq, 1), jnp.float32),     # running row max
            pltpu.VMEM((H, tq, 1), jnp.float32),     # running row sum
            pltpu.VMEM((H, tq, hd), jnp.float32),    # f32 output accumulator
            pltpu.VMEM((tq, C), jnp.bfloat16),       # lane-dense merged-heads slab
        ],
        compiler_params=pltpu.CompilerParams(
            dimension_semantics=("parallel", "parallel", "arbitrary"),
            vmem_limit_bytes=vmem_limit),
    )(x_bf, k_hm, v_hm, wq, wproj, bproj)
    return out


def attention(x, wqkv, wproj, bproj, num_heads, *, approx_softmax_recip=True):
    """Forward of the PyTorch Attention (qkv_bias=False, dropout p=0, eval mode).

    x:     (B, N, C) f32
    wqkv:  (C, 3C)   pre-transposed fused qkv weight  (y = x @ W)
    wproj: (C, C)    pre-transposed output projection weight
    bproj: (C,)      output projection bias

    approx_softmax_recip: use the EUP approximate reciprocal for the softmax
    denominator (deliberate, small accuracy trade); set False for a closer match
    to the f32 reference.
    """
    B, N, C = x.shape
    hd = C // num_heads
    scale = hd ** (-0.5)

    # One-time weight/activation prep (constant transforms, not per-token work):
    #  * fold 1/sqrt(hd) into the Q slice of Wqkv,
    #  * keep K|V fused as a single (C, 2C) weight (one matmul in kernel 1),
    #  * cast matmul weights AND the activation to bf16 (halves HBM bytes; the
    #    kernels already ran all matmuls in bf16, so numerics are unchanged).
    wq = (wqkv[:, :C] * scale).astype(jnp.bfloat16)
    wkv = wqkv[:, C:].astype(jnp.bfloat16)            # [K | V], shape (C, 2C)
    wproj_bf = wproj.astype(jnp.bfloat16)
    bproj2d = bproj.reshape(1, C).astype(jnp.float32)
    x_bf = x.astype(jnp.bfloat16)

    return _attention_pallas(x_bf, wq, wkv, wproj_bf, bproj2d, num_heads,
                             x.dtype, approx_recip=approx_softmax_recip)


def attention_ref(x, wqkv, wproj, bproj, num_heads):
    """Pure-JAX reference mirroring the PyTorch forward (f32 throughout)."""
    B, N, C = x.shape
    hd = C // num_heads
    scale = hd ** (-0.5)
    qkv = x @ wqkv
    qkv = qkv.reshape(B, N, 3, num_heads, hd).transpose(2, 0, 3, 1, 4)
    q, k, v = qkv[0] * scale, qkv[1], qkv[2]
    attn = jax.nn.softmax(jnp.einsum("bhnd,bhmd->bhnm", q, k), axis=-1)
    o = jnp.einsum("bhnm,bhmd->bhnd", attn, v)
    o = o.transpose(0, 2, 1, 3).reshape(B, N, C)
    return o @ wproj + bproj


if __name__ == "__main__":
    B, N, C = 2, 8, 32
    num_heads = 8

    key = jax.random.PRNGKey(0)
    kx, kq, kp, kb = jax.random.split(key, 4)
    x = jax.random.normal(kx, (B, N, C), dtype=jnp.float32)
    wqkv = jax.random.normal(kq, (C, 3 * C), dtype=jnp.float32) * 0.05
    wproj = jax.random.normal(kp, (C, C), dtype=jnp.float32) * 0.05
    bproj = jax.random.normal(kb, (C,), dtype=jnp.float32) * 0.05

    out = attention(x, wqkv, wproj, bproj, num_heads)
    out = jax.block_until_ready(out)

    ref = attention_ref(x, wqkv, wproj, bproj, num_heads)
    assert out.shape == (B, N, C)
    # bf16 matmul operands (f32 accumulation) -> modest tolerance vs f32 reference.
    max_err = float(jnp.max(jnp.abs(out - ref)))
    assert max_err < 5e-2, f"mismatch vs reference: max abs err {max_err}"

    print("KERNEL_OK")
</pallas_src>

<mosaic_0001>
module attributes {stable_mosaic.version = 11 : i64} {
  func.func @_probe(%arg0: i32, %arg1: memref<8x128xf32, #tpu.memory_space<vmem>>, %arg2: memref<8x128xf32, #tpu.memory_space<vmem>>) attributes {dimension_semantics = [#tpu.dimension_semantics<arbitrary>], iteration_bounds = array<i64: 1>, scalar_prefetch = 0 : i64, scratch_operands = 0 : i64, tpu.core_type = #tpu.core_type<tc>, window_params = [{pipeline_mode = #tpu.pipeline_mode<synchronous>, transform_indices = @transform_0, window_bounds = array<i64: 8, 128>}, {pipeline_mode = #tpu.pipeline_mode<synchronous>, transform_indices = @transform_1, window_bounds = array<i64: 8, 128>}]} {
    %c0 = arith.constant 0 : index
    %c0_0 = arith.constant 0 : index
    %0 = vector.load %arg1[%c0, %c0_0] : memref<8x128xf32, #tpu.memory_space<vmem>>, vector<8x128xf32>
    %c0_1 = arith.constant 0 : index
    %c0_2 = arith.constant 0 : index
    %1 = vector.load %arg2[%c0_1, %c0_2] : memref<8x128xf32, #tpu.memory_space<vmem>>, vector<8x128xf32>
    tpu.vector_store %arg2[%c0_1, %c0_2], %0 {strides = array<i32>} : memref<8x128xf32, #tpu.memory_space<vmem>>, vector<8x128xf32>,
    return
  }
  func.func @transform_0(%arg0: i32) -> (i32, i32) {
    %c0_i32 = arith.constant 0 : i32
    %c0_i32_0 = arith.constant 0 : i32
    %c0_i32_1 = arith.constant 0 : i32
    return %c0_i32, %c0_i32_0 : i32, i32
  }
  func.func @transform_1(%arg0: i32) -> (i32, i32) {
    %c0_i32 = arith.constant 0 : i32
    %c0_i32_0 = arith.constant 0 : i32
    %c0_i32_1 = arith.constant 0 : i32
    return %c0_i32, %c0_i32_0 : i32, i32
  }
}

module attributes {stable_mosaic.version = 11 : i64} {
  func.func @kv_proj_kernel(%arg0: i32, %arg1: i32, %arg2: memref<1x8x32xbf16, #tpu.memory_space<vmem>>, %arg3: memref<32x64xbf16, #tpu.memory_space<vmem>>, %arg4: memref<1x8x8x4xbf16, #tpu.memory_space<vmem>>, %arg5: memref<1x8x8x5xbf16, #tpu.memory_space<vmem>>) attributes {dimension_semantics = [#tpu.dimension_semantics<parallel>, #tpu.dimension_semantics<parallel>], iteration_bounds = array<i64: 2, 1>, scalar_prefetch = 0 : i64, scratch_operands = 0 : i64, tpu.core_type = #tpu.core_type<tc>, window_params = [{transform_indices = @transform_0, window_bounds = array<i64: 1, 8, 32>}, {pipeline_mode = #tpu.pipeline_mode<synchronous>, transform_indices = @transform_1, window_bounds = array<i64: 32, 64>}, {transform_indices = @transform_2, window_bounds = array<i64: 1, 8, 8, 4>}, {transform_indices = @transform_3, window_bounds = array<i64: 1, 8, 8, 5>}]} {
    %c0 = arith.constant 0 : index
    %c0_0 = arith.constant 0 : index
    %c0_1 = arith.constant 0 : index
    %0 = vector.load %arg2[%c0, %c0_0, %c0_1] : memref<1x8x32xbf16, #tpu.memory_space<vmem>>, vector<1x8x32xbf16>
    %1 = vector.shape_cast %0 : vector<1x8x32xbf16> to vector<8x32xbf16>
    %c0_2 = arith.constant 0 : index
    %c0_3 = arith.constant 0 : index
    %2 = vector.load %arg3[%c0_2, %c0_3] : memref<32x64xbf16, #tpu.memory_space<vmem>>, vector<32x64xbf16>
    %cst = arith.constant dense<0.000000e+00> : vector<8x64xf32>
    %3 = tpu.matmul %1, %2, %cst {dimension_numbers = #tpu.dot_dimension_numbers<[1], [0], [0], [1], [0, 0, 1, 1], [], []>} : vector<8x32xbf16>, vector<32x64xbf16>, vector<8x64xf32> -> vector<8x64xf32>
    %cst_4 = arith.constant 1.000000e+00 : bf16
    %4 = vector.broadcast %cst_4 : bf16 to vector<8x1xbf16>
    %5 = vector.extract_strided_slice %3 {offsets = [0, 0], sizes = [8, 4], strides = [1, 1]} : vector<8x64xf32> to vector<8x4xf32>
    %6 = arith.truncf %5 : vector<8x4xf32> to vector<8x4xbf16>
    %c0_5 = arith.constant 0 : index
    %c0_6 = arith.constant 0 : index
    %c0_7 = arith.constant 0 : index
    %c0_8 = arith.constant 0 : index
    %7 = vector.load %arg4[%c0_5, %c0_6, %c0_7, %c0_8] : memref<1x8x8x4xbf16, #tpu.memory_space<vmem>>, vector<1x1x8x4xbf16>
    %8 = vector.shape_cast %7 : vector<1x1x8x4xbf16> to vector<8x4xbf16>
    %9 = vector.shape_cast %6 : vector<8x4xbf16> to vector<1x1x8x4xbf16>
    tpu.vector_store %arg4[%c0_5, %c0_6, %c0_7, %c0_8], %9 {strides = array<i32>} : memref<1x8x8x4xbf16, #tpu.memory_space<vmem>>, vector<1x1x8x4xbf16>,
    %10 = vector.extract_strided_slice %3 {offsets = [0, 32], sizes = [8, 4], strides = [1, 1]} : vector<8x64xf32> to vector<8x4xf32>
    %11 = arith.truncf %10 : vector<8x4xf32> to vector<8x4xbf16>
    %12 = tpu.concatenate %11, %4 in 1 : vector<8x4xbf16>, vector<8x1xbf16> -> vector<8x5xbf16>
    %c0_9 = arith.constant 0 : index
    %c0_10 = arith.constant 0 : index
    %c0_11 = arith.constant 0 : index
    %c0_12 = arith.constant 0 : index
    %13 = vector.load %arg5[%c0_9, %c0_10, %c0_11, %c0_12] : memref<1x8x8x5xbf16, #tpu.memory_space<vmem>>, vector<1x1x8x5xbf16>
    %14 = vector.shape_cast %13 : vector<1x1x8x5xbf16> to vector<8x5xbf16>
    %15 = vector.shape_cast %12 : vector<8x5xbf16> to vector<1x1x8x5xbf16>
    tpu.vector_store %arg5[%c0_9, %c0_10, %c0_11, %c0_12], %15 {strides = array<i32>} : memref<1x8x8x5xbf16, #tpu.memory_space<vmem>>, vector<1x1x8x5xbf16>,
    %16 = vector.extract_strided_slice %3 {offsets = [0, 4], sizes = [8, 4], strides = [1, 1]} : vector<8x64xf32> to vector<8x4xf32>
    %17 = arith.truncf %16 : vector<8x4xf32> to vector<8x4xbf16>
    %c0_13 = arith.constant 0 : index
    %c1 = arith.constant 1 : index
    %c0_14 = arith.constant 0 : index
    %c0_15 = arith.constant 0 : index
    %18 = vector.load %arg4[%c0_13, %c1, %c0_14, %c0_15] : memref<1x8x8x4xbf16, #tpu.memory_space<vmem>>, vector<1x1x8x4xbf16>
    %19 = vector.shape_cast %18 : vector<1x1x8x4xbf16> to vector<8x4xbf16>
    %20 = vector.shape_cast %17 : vector<8x4xbf16> to vector<1x1x8x4xbf16>
    tpu.vector_store %arg4[%c0_13, %c1, %c0_14, %c0_15], %20 {strides = array<i32>} : memref<1x8x8x4xbf16, #tpu.memory_space<vmem>>, vector<1x1x8x4xbf16>,
    %21 = vector.extract_strided_slice %3 {offsets = [0, 36], sizes = [8, 4], strides = [1, 1]} : vector<8x64xf32> to vector<8x4xf32>
    %22 = arith.truncf %21 : vector<8x4xf32> to vector<8x4xbf16>
    %23 = tpu.concatenate %22, %4 in 1 : vector<8x4xbf16>, vector<8x1xbf16> -> vector<8x5xbf16>
    %c0_16 = arith.constant 0 : index
    %c1_17 = arith.constant 1 : index
    %c0_18 = arith.constant 0 : index
    %c0_19 = arith.constant 0 : index
    %24 = vector.load %arg5[%c0_16, %c1_17, %c0_18, %c0_19] : memref<1x8x8x5xbf16, #tpu.memory_space<vmem>>, vector<1x1x8x5xbf16>
    %25 = vector.shape_cast %24 : vector<1x1x8x5xbf16> to vector<8x5xbf16>
    %26 = vector.shape_cast %23 : vector<8x5xbf16> to vector<1x1x8x5xbf16>
    tpu.vector_store %arg5[%c0_16, %c1_17, %c0_18, %c0_19], %26 {strides = array<i32>} : memref<1x8x8x5xbf16, #tpu.memory_space<vmem>>, vector<1x1x8x5xbf16>,
    %27 = vector.extract_strided_slice %3 {offsets = [0, 8], sizes = [8, 4], strides = [1, 1]} : vector<8x64xf32> to vector<8x4xf32>
    %28 = arith.truncf %27 : vector<8x4xf32> to vector<8x4xbf16>
    %c0_20 = arith.constant 0 : index
    %c2 = arith.constant 2 : index
    %c0_21 = arith.constant 0 : index
    %c0_22 = arith.constant 0 : index
    %29 = vector.load %arg4[%c0_20, %c2, %c0_21, %c0_22] : memref<1x8x8x4xbf16, #tpu.memory_space<vmem>>, vector<1x1x8x4xbf16>
    %30 = vector.shape_cast %29 : vector<1x1x8x4xbf16> to vector<8x4xbf16>
    %31 = vector.shape_cast %28 : vector<8x4xbf16> to vector<1x1x8x4xbf16>
    tpu.vector_store %arg4[%c0_20, %c2, %c0_21, %c0_22], %31 {strides = array<i32>} : memref<1x8x8x4xbf16, #tpu.memory_space<vmem>>, vector<1x1x8x4xbf16>,
    %32 = vector.extract_strided_slice %3 {offsets = [0, 40], sizes = [8, 4], strides = [1, 1]} : vector<8x64xf32> to vector<8x4xf32>
    %33 = arith.truncf %32 : vector<8x4xf32> to vector<8x4xbf16>
    %34 = tpu.concatenate %33, %4 in 1 : vector<8x4xbf16>, vector<8x1xbf16> -> vector<8x5xbf16>
    %c0_23 = arith.constant 0 : index
    %c2_24 = arith.constant 2 : index
    %c0_25 = arith.constant 0 : index
    %c0_26 = arith.constant 0 : index
    %35 = vector.load %arg5[%c0_23, %c2_24, %c0_25, %c0_26] : memref<1x8x8x5xbf16, #tpu.memory_space<vmem>>, vector<1x1x8x5xbf16>
    %36 = vector.shape_cast %35 : vector<1x1x8x5xbf16> to vector<8x5xbf16>
    %37 = vector.shape_cast %34 : vector<8x5xbf16> to vector<1x1x8x5xbf16>
    tpu.vector_store %arg5[%c0_23, %c2_24, %c0_25, %c0_26], %37 {strides = array<i32>} : memref<1x8x8x5xbf16, #tpu.memory_space<vmem>>, vector<1x1x8x5xbf16>,
    %38 = vector.extract_strided_slice %3 {offsets = [0, 12], sizes = [8, 4], strides = [1, 1]} : vector<8x64xf32> to vector<8x4xf32>
    %39 = arith.truncf %38 : vector<8x4xf32> to vector<8x4xbf16>
    %c0_27 = arith.constant 0 : index
    %c3 = arith.constant 3 : index
    %c0_28 = arith.constant 0 : index
    %c0_29 = arith.constant 0 : index
    %40 = vector.load %arg4[%c0_27, %c3, %c0_28, %c0_29] : memref<1x8x8x4xbf16, #tpu.memory_space<vmem>>, vector<1x1x8x4xbf16>
    %41 = vector.shape_cast %40 : vector<1x1x8x4xbf16> to vector<8x4xbf16>
    %42 = vector.shape_cast %39 : vector<8x4xbf16> to vector<1x1x8x4xbf16>
    tpu.vector_store %arg4[%c0_27, %c3, %c0_28, %c0_29], %42 {strides = array<i32>} : memref<1x8x8x4xbf16, #tpu.memory_space<vmem>>, vector<1x1x8x4xbf16>,
    %43 = vector.extract_strided_slice %3 {offsets = [0, 44], sizes = [8, 4], strides = [1, 1]} : vector<8x64xf32> to vector<8x4xf32>
    %44 = arith.truncf %43 : vector<8x4xf32> to vector<8x4xbf16>
    %45 = tpu.concatenate %44, %4 in 1 : vector<8x4xbf16>, vector<8x1xbf16> -> vector<8x5xbf16>
    %c0_30 = arith.constant 0 : index
    %c3_31 = arith.constant 3 : index
    %c0_32 = arith.constant 0 : index
    %c0_33 = arith.constant 0 : index
    %46 = vector.load %arg5[%c0_30, %c3_31, %c0_32, %c0_33] : memref<1x8x8x5xbf16, #tpu.memory_space<vmem>>, vector<1x1x8x5xbf16>
    %47 = vector.shape_cast %46 : vector<1x1x8x5xbf16> to vector<8x5xbf16>
    %48 = vector.shape_cast %45 : vector<8x5xbf16> to vector<1x1x8x5xbf16>
    tpu.vector_store %arg5[%c0_30, %c3_31, %c0_32, %c0_33], %48 {strides = array<i32>} : memref<1x8x8x5xbf16, #tpu.memory_space<vmem>>, vector<1x1x8x5xbf16>,
    %49 = vector.extract_strided_slice %3 {offsets = [0, 16], sizes = [8, 4], strides = [1, 1]} : vector<8x64xf32> to vector<8x4xf32>
    %50 = arith.truncf %49 : vector<8x4xf32> to vector<8x4xbf16>
    %c0_34 = arith.constant 0 : index
    %c4 = arith.constant 4 : index
    %c0_35 = arith.constant 0 : index
    %c0_36 = arith.constant 0 : index
    %51 = vector.load %arg4[%c0_34, %c4, %c0_35, %c0_36] : memref<1x8x8x4xbf16, #tpu.memory_space<vmem>>, vector<1x1x8x4xbf16>
    %52 = vector.shape_cast %51 : vector<1x1x8x4xbf16> to vector<8x4xbf16>
    %53 = vector.shape_cast %50 : vector<8x4xbf16> to vector<1x1x8x4xbf16>
    tpu.vector_store %arg4[%c0_34, %c4, %c0_35, %c0_36], %53 {strides = array<i32>} : memref<1x8x8x4xbf16, #tpu.memory_space<vmem>>, vector<1x1x8x4xbf16>,
    %54 = vector.extract_strided_slice %3 {offsets = [0, 48], sizes = [8, 4], strides = [1, 1]} : vector<8x64xf32> to vector<8x4xf32>
    %55 = arith.truncf %54 : vector<8x4xf32> to vector<8x4xbf16>
    %56 = tpu.concatenate %55, %4 in 1 : vector<8x4xbf16>, vector<8x1xbf16> -> vector<8x5xbf16>
    %c0_37 = arith.constant 0 : index
    %c4_38 = arith.constant 4 : index
    %c0_39 = arith.constant 0 : index
    %c0_40 = arith.constant 0 : index
    %57 = vector.load %arg5[%c0_37, %c4_38, %c0_39, %c0_40] : memref<1x8x8x5xbf16, #tpu.memory_space<vmem>>, vector<1x1x8x5xbf16>
    %58 = vector.shape_cast %57 : vector<1x1x8x5xbf16> to vector<8x5xbf16>
    %59 = vector.shape_cast %56 : vector<8x5xbf16> to vector<1x1x8x5xbf16>
    tpu.vector_store %arg5[%c0_37, %c4_38, %c0_39, %c0_40], %59 {strides = array<i32>} : memref<1x8x8x5xbf16, #tpu.memory_space<vmem>>, vector<1x1x8x5xbf16>,
    %60 = vector.extract_strided_slice %3 {offsets = [0, 20], sizes = [8, 4], strides = [1, 1]} : vector<8x64xf32> to vector<8x4xf32>
    %61 = arith.truncf %60 : vector<8x4xf32> to vector<8x4xbf16>
    %c0_41 = arith.constant 0 : index
    %c5 = arith.constant 5 : index
    %c0_42 = arith.constant 0 : index
    %c0_43 = arith.constant 0 : index
    %62 = vector.load %arg4[%c0_41, %c5, %c0_42, %c0_43] : memref<1x8x8x4xbf16, #tpu.memory_space<vmem>>, vector<1x1x8x4xbf16>
    %63 = vector.shape_cast %62 : vector<1x1x8x4xbf16> to vector<8x4xbf16>
    %64 = vector.shape_cast %61 : vector<8x4xbf16> to vector<1x1x8x4xbf16>
    tpu.vector_store %arg4[%c0_41, %c5, %c0_42, %c0_43], %64 {strides = array<i32>} : memref<1x8x8x4xbf16, #tpu.memory_space<vmem>>, vector<1x1x8x4xbf16>,
    %65 = vector.extract_strided_slice %3 {offsets = [0, 52], sizes = [8, 4], strides = [1, 1]} : vector<8x64xf32> to vector<8x4xf32>
    %66 = arith.truncf %65 : vector<8x4xf32> to vector<8x4xbf16>
    %67 = tpu.concatenate %66, %4 in 1 : vector<8x4xbf16>, vector<8x1xbf16> -> vector<8x5xbf16>
    %c0_44 = arith.constant 0 : index
    %c5_45 = arith.constant 5 : index
    %c0_46 = arith.constant 0 : index
    %c0_47 = arith.constant 0 : index
    %68 = vector.load %arg5[%c0_44, %c5_45, %c0_46, %c0_47] : memref<1x8x8x5xbf16, #tpu.memory_space<vmem>>, vector<1x1x8x5xbf16>
    %69 = vector.shape_cast %68 : vector<1x1x8x5xbf16> to vector<8x5xbf16>
    %70 = vector.shape_cast %67 : vector<8x5xbf16> to vector<1x1x8x5xbf16>
    tpu.vector_store %arg5[%c0_44, %c5_45, %c0_46, %c0_47], %70 {strides = array<i32>} : memref<1x8x8x5xbf16, #tpu.memory_space<vmem>>, vector<1x1x8x5xbf16>,
    %71 = vector.extract_strided_slice %3 {offsets = [0, 24], sizes = [8, 4], strides = [1, 1]} : vector<8x64xf32> to vector<8x4xf32>
    %72 = arith.truncf %71 : vector<8x4xf32> to vector<8x4xbf16>
    %c0_48 = arith.constant 0 : index
    %c6 = arith.constant 6 : index
    %c0_49 = arith.constant 0 : index
    %c0_50 = arith.constant 0 : index
    %73 = vector.load %arg4[%c0_48, %c6, %c0_49, %c0_50] : memref<1x8x8x4xbf16, #tpu.memory_space<vmem>>, vector<1x1x8x4xbf16>
    %74 = vector.shape_cast %73 : vector<1x1x8x4xbf16> to vector<8x4xbf16>
    %75 = vector.shape_cast %72 : vector<8x4xbf16> to vector<1x1x8x4xbf16>
    tpu.vector_store %arg4[%c0_48, %c6, %c0_49, %c0_50], %75 {strides = array<i32>} : memref<1x8x8x4xbf16, #tpu.memory_space<vmem>>, vector<1x1x8x4xbf16>,
    %76 = vector.extract_strided_slice %3 {offsets = [0, 56], sizes = [8, 4], strides = [1, 1]} : vector<8x64xf32> to vector<8x4xf32>
    %77 = arith.truncf %76 : vector<8x4xf32> to vector<8x4xbf16>
    %78 = tpu.concatenate %77, %4 in 1 : vector<8x4xbf16>, vector<8x1xbf16> -> vector<8x5xbf16>
    %c0_51 = arith.constant 0 : index
    %c6_52 = arith.constant 6 : index
    %c0_53 = arith.constant 0 : index
    %c0_54 = arith.constant 0 : index
    %79 = vector.load %arg5[%c0_51, %c6_52, %c0_53, %c0_54] : memref<1x8x8x5xbf16, #tpu.memory_space<vmem>>, vector<1x1x8x5xbf16>
    %80 = vector.shape_cast %79 : vector<1x1x8x5xbf16> to vector<8x5xbf16>
    %81 = vector.shape_cast %78 : vector<8x5xbf16> to vector<1x1x8x5xbf16>
    tpu.vector_store %arg5[%c0_51, %c6_52, %c0_53, %c0_54], %81 {strides = array<i32>} : memref<1x8x8x5xbf16, #tpu.memory_space<vmem>>, vector<1x1x8x5xbf16>,
    %82 = vector.extract_strided_slice %3 {offsets = [0, 28], sizes = [8, 4], strides = [1, 1]} : vector<8x64xf32> to vector<8x4xf32>
    %83 = arith.truncf %82 : vector<8x4xf32> to vector<8x4xbf16>
    %c0_55 = arith.constant 0 : index
    %c7 = arith.constant 7 : index
    %c0_56 = arith.constant 0 : index
    %c0_57 = arith.constant 0 : index
    %84 = vector.load %arg4[%c0_55, %c7, %c0_56, %c0_57] : memref<1x8x8x4xbf16, #tpu.memory_space<vmem>>, vector<1x1x8x4xbf16>
    %85 = vector.shape_cast %84 : vector<1x1x8x4xbf16> to vector<8x4xbf16>
    %86 = vector.shape_cast %83 : vector<8x4xbf16> to vector<1x1x8x4xbf16>
    tpu.vector_store %arg4[%c0_55, %c7, %c0_56, %c0_57], %86 {strides = array<i32>} : memref<1x8x8x4xbf16, #tpu.memory_space<vmem>>, vector<1x1x8x4xbf16>,
    %87 = vector.extract_strided_slice %3 {offsets = [0, 60], sizes = [8, 4], strides = [1, 1]} : vector<8x64xf32> to vector<8x4xf32>
    %88 = arith.truncf %87 : vector<8x4xf32> to vector<8x4xbf16>
    %89 = tpu.concatenate %88, %4 in 1 : vector<8x4xbf16>, vector<8x1xbf16> -> vector<8x5xbf16>
    %c0_58 = arith.constant 0 : index
    %c7_59 = arith.constant 7 : index
    %c0_60 = arith.constant 0 : index
    %c0_61 = arith.constant 0 : index
    %90 = vector.load %arg5[%c0_58, %c7_59, %c0_60, %c0_61] : memref<1x8x8x5xbf16, #tpu.memory_space<vmem>>, vector<1x1x8x5xbf16>
    %91 = vector.shape_cast %90 : vector<1x1x8x5xbf16> to vector<8x5xbf16>
    %92 = vector.shape_cast %89 : vector<8x5xbf16> to vector<1x1x8x5xbf16>
    tpu.vector_store %arg5[%c0_58, %c7_59, %c0_60, %c0_61], %92 {strides = array<i32>} : memref<1x8x8x5xbf16, #tpu.memory_space<vmem>>, vector<1x1x8x5xbf16>,
    return
  }
  func.func @transform_0(%arg0: i32, %arg1: i32) -> (i32, i32, i32) {
    %c0_i32 = arith.constant 0 : i32
    %c0_i32_0 = arith.constant 0 : i32
    return %arg0, %arg1, %c0_i32 : i32, i32, i32
  }
  func.func @transform_1(%arg0: i32, %arg1: i32) -> (i32, i32) {
    %c0_i32 = arith.constant 0 : i32
    %c0_i32_0 = arith.constant 0 : i32
    %c0_i32_1 = arith.constant 0 : i32
    return %c0_i32, %c0_i32_0 : i32, i32
  }
  func.func @transform_2(%arg0: i32, %arg1: i32) -> (i32, i32, i32, i32) {
    %c0_i32 = arith.constant 0 : i32
    %c0_i32_0 = arith.constant 0 : i32
    %c0_i32_1 = arith.constant 0 : i32
    return %arg0, %c0_i32, %arg1, %c0_i32_0 : i32, i32, i32, i32
  }
  func.func @transform_3(%arg0: i32, %arg1: i32) -> (i32, i32, i32, i32) {
    %c0_i32 = arith.constant 0 : i32
    %c0_i32_0 = arith.constant 0 : i32
    %c0_i32_1 = arith.constant 0 : i32
    return %arg0, %c0_i32, %arg1, %c0_i32_0 : i32, i32, i32, i32
  }
}

</mosaic_0001>

<llo_original>
// kernel: tpu_custom_call.1
$region0: #{tpu_custom_call.1}
  #allocation0 [shape = 'u32[]', space=smem, size = 0x4, offset = 0x4, fixed_abs, tag = 'smem constant byte address 0x4 - core index']
  #allocation1 [shape = 'u32[72,128]{1,0:T(1,128)}', space=vmem, size = 0x9000, scoped, tag = 'internal scratch']
  %s0 = inlined_call_operand.hbm [shape: f32[8,128], index: 0, kind: input, shape index: {}]
  %s1 = inlined_call_operand.hbm [shape: f32[8,128], index: 1, kind: output, shape index: {}]
  %s2 = sld [smem:[#allocation0]]
  $region18: #{tpu_custom_call.1} parent=0
    _
  %s4 = ssub.s32 1, %s2
  %s5 = scalar_select 0, %s4, %s2
  $region1: #{tpu_custom_call.1} parent=0
    #allocation2 [shape = 'u8[4096]{0}', space=vmem, size = 0x1000, scoped, tag = 'input window, operand 0, single buffered']
    #allocation3 [shape = 's32[1]{0}', space=sflag, size = 0x4, scoped, tag = 'scoped memory for tpu_custom_call.1']
    #allocation4 [shape = 's32[1]{0}', space=sflag, size = 0x4, scoped, tag = 'scoped memory for tpu_custom_call.1']
    #allocation5 [shape = 'u8[4096]{0}', space=vmem, size = 0x1000, scoped, tag = 'output window, operand 0, single buffered']
    %6 = vsyncpa [#allocation3], 0
    %7 = vsyncpa [#allocation4], 0
    // Predicated region
    $region2: #{tpu_custom_call.1} parent=1 // pred_check
      _
    $region3: #{tpu_custom_call.1} parent=1 // pred_check_branch
      %9 = sbr.rel (0) target = $region5
    $region4: #{tpu_custom_call.1} parent=1 // pred_region
      %11 = vsyncadd [#allocation3], 0
      %s13 = sshll.u32 %s0, 4
      %s14 = int_to_ptr.hbm [resolvable:$true] %s13
      %s15 = sshll.u32 [#allocation2], 4
      %s16 = int_to_ptr.vmem [resolvable:$true] %s15
      %18 = dma.hbm_to_vmem [thread:$0]  %s14, 128, %s16, [#allocation3]
    $region5: #{tpu_custom_call.1} parent=1 // pred_fallthru
      _
    // Predicated region
    $region6: #{tpu_custom_call.1} parent=1 // pred_check
      _
    $region7: #{tpu_custom_call.1} parent=1 // pred_check_branch
      %20 = sbr.rel (0) target = $region9
    $region8: #{tpu_custom_call.1} parent=1 // pred_region
      %22 = dma.done [#allocation3], 128
    $region9: #{tpu_custom_call.1} parent=1 // pred_fallthru
      _
    %v23 = vld [vmem:[#allocation2] sm:$0xff]
    %24 = vst [vmem:[#allocation5] sm:$0xff] %v23
    // Predicated region
    $region10: #{tpu_custom_call.1} parent=1 // pred_check
      _
    $region11: #{tpu_custom_call.1} parent=1 // pred_check_branch
      %26 = sbr.rel (0) target = $region13
    $region12: #{tpu_custom_call.1} parent=1 // pred_region
      %28 = vsyncadd [#allocation4], 0
      %s30 = sshll.u32 [#allocation5], 4
      %s31 = int_to_ptr.vmem [resolvable:$true] %s30
      %s32 = sshll.u32 %s1, 4
      %s33 = int_to_ptr.hbm [resolvable:$true] %s32
      %35 = dma.vmem_to_hbm [thread:$0]  %s31, 128, %s33, [#allocation4]
    $region13: #{tpu_custom_call.1} parent=1 // pred_fallthru
      _
    // Predicated region
    $region14: #{tpu_custom_call.1} parent=1 // pred_check
      _
    $region15: #{tpu_custom_call.1} parent=1 // pred_check_branch
      %37 = sbr.rel (0) target = $region17
    $region16: #{tpu_custom_call.1} parent=1 // pred_region
      %39 = dma.done [#allocation4], 128
    $region17: #{tpu_custom_call.1} parent=1 // pred_fallthru
      _
    %40 = vsyncpa [#allocation3], 1
    %41 = vsyncpa [#allocation4], 1

// kernel: tpu_custom_call.1
$region0: #{tpu_custom_call.1}
  #allocation0 [shape = 'u32[]', space=smem, size = 0x4, offset = 0x4, fixed_abs, tag = 'smem constant byte address 0x4 - core index']
  #allocation1 [shape = 'u32[72,128]{1,0:T(1,128)}', space=vmem, size = 0x9000, scoped, tag = 'internal scratch']
  %s0 = inlined_call_operand.hbm [shape: bf16[2,8,32], index: 0, kind: input, shape index: {}]
  %s1 = inlined_call_operand.hbm [shape: bf16[32,64], index: 1, kind: input, shape index: {}]
  %s2 = inlined_call_operand.vmem [shape: bf16[2,8,8,4], index: 2, kind: output, shape index: {0}]
  %s3 = inlined_call_operand.vmem [shape: bf16[2,8,8,5], index: 3, kind: output, shape index: {1}]
  %4 = xla_tuple %s2, %s3
  %s5 = sld [smem:[#allocation0]]
  $region57: #{tpu_custom_call.1} parent=0
    _
  %s7 = ssub.s32 1, %s5
  %s8 = scalar_select 0, %s7, %s5
  $region1: #{tpu_custom_call.1} parent=0
    #allocation2 [shape = 'u8[4096]{0}', space=vmem, size = 0x1000, scoped, tag = 'input window, operand 0']
    #allocation3 [shape = 's32[2]{0}', space=sflag, size = 0x8, scoped, tag = 'scoped memory for tpu_custom_call.1']
    #allocation4 [shape = 'u8[8192]{0}', space=vmem, size = 0x2000, scoped, tag = 'input window, operand 1, single buffered']
    #allocation5 [shape = 's32[1]{0}', space=sflag, size = 0x4, scoped, tag = 'scoped memory for tpu_custom_call.1']
    %9 = vsyncpa [#allocation3], 0
    %s10 = scalar_lea.sflag [#allocation3], 1
    %11 = vsyncpa %s10, 0
    %12 = vsyncpa [#allocation5], 0
    loop: start=0, step=1, limit=4
    $region2: #{tpu_custom_call.1} parent=1 // loop_pre_header
      _
    $region3: #{tpu_custom_call.1} parent=1 // loop_header
      %s14 = sphi 0, %s18
      %p15 = scmp.ge.s32.totalorder %s14, 4
      %s21 = sphi 0, %s33
      %s22 = sphi 0, %s29
      %s23 = sphi 0, %s21
      %s24 = sphi 0, %s22
      %s25 = sphi 0, %s23
      %s26 = sphi 0, %s24
      %s38 = sphi 0, %s40
      %s41 = sphi 0, %s38
      %s42 = sphi 0, %s41
      %s58 = sphi 0, %s42
      %s62 = sphi 0, %s62
      %s64 = sphi 0, %s62
      %s65 = sphi 0, %s64
      %s79 = sphi 0, %s65
      %s87 = sphi 0, %s89
      %s90 = sphi 0, %s87
      %s91 = sphi 0, %s90
      %s107 = sphi 0, %s91
      %s115 = sphi 0, %s117
      %s118 = sphi 0, %s115
      %s119 = sphi 0, %s118
      %s135 = sphi 0, %s119
    $region4: #{tpu_custom_call.1} parent=1 // loop_header_branch
      %17 = sbr.rel (%p15) target = $region8
    $region5: #{tpu_custom_call.1} parent=1 // loop_body
      %s19 = ssub.s32 %s14, 1
      %s20 = ssub.s32 %s14, 2
      %s27 = sadd.s32 1, %s22
      %p28 = scmp.ge.s32.totalorder %s27, 1
      %s29 = scalar_select %p28, 0, %s27
      %s30 = sadd.s32 1, %s21
      %s31 = scalar_select %p28, %s30, %s21
      %p32 = scmp.ge.s32.totalorder %s31, 2
      %s33 = scalar_select %p32, 0, %s31
      %s34 = ssub.s32 %s21, %s33
      %s35 = ssub.s32 %s22, %s29
      %s36 = sor.u32 %s34, %s35
      %p37 = scmp.eq.s32.totalorder %s36, 0
      %s39 = sadd.s32 %s38, 1
      %s40 = scalar_select %p37, %s38, %s39
      %p43 = pneg %p37
      %p44 = scmp.eq.s32.totalorder %s14, 1
      %p45 = por %p43, %p44
      %p46 = scmp.ne.s32.totalorder %s38, %s41
      %p47 = scmp.eq.s32.totalorder %s14, 0
      %p48 = por %p46, %p47
      %p49 = scmp.ne.s32.totalorder %s38, %s41
      %p50 = scmp.eq.s32.totalorder %s19, 1
      %p51 = por %p49, %p50
      %p52 = scmp.ne.s32.totalorder %s41, %s42
      %p53 = scmp.eq.s32.totalorder %s19, 0
      %p54 = por %p52, %p53
      %p55 = scmp.ne.s32.totalorder %s41, %s42
      %p56 = scmp.eq.s32.totalorder %s20, 1
      %p57 = por %p55, %p56
      %p59 = scmp.ne.s32.totalorder %s42, %s58
      %p60 = scmp.eq.s32.totalorder %s20, 0
      %p61 = por %p59, %p60
      %s63 = sadd.s32 %s62, 1
      %p66 = scmp.eq.s32.totalorder %s14, 1
      %p67 = scmp.ne.s32.totalorder %s62, %s64
      %p68 = scmp.eq.s32.totalorder %s14, 0
      %p69 = por %p67, %p68
      %p70 = scmp.ne.s32.totalorder %s62, %s64
      %p71 = scmp.eq.s32.totalorder %s19, 1
      %p72 = por %p70, %p71
      %p73 = scmp.ne.s32.totalorder %s64, %s65
      %p74 = scmp.eq.s32.totalorder %s19, 0
      %p75 = por %p73, %p74
      %p76 = scmp.ne.s32.totalorder %s64, %s65
      %p77 = scmp.eq.s32.totalorder %s20, 1
      %p78 = por %p76, %p77
      %p80 = scmp.ne.s32.totalorder %s65, %s79
      %p81 = scmp.eq.s32.totalorder %s20, 0
      %p82 = por %p80, %p81
      %s83 = ssub.s32 %s21, %s33
      %s84 = ssub.s32 %s22, %s29
      %s85 = sor.u32 %s83, %s84
      %p86 = scmp.eq.s32.totalorder %s85, 0
      %s88 = sadd.s32 %s87, 1
      %s89 = scalar_select %p86, %s87, %s88
      %p92 = pneg %p86
      %p93 = scmp.eq.s32.totalorder %s14, 1
      %p94 = por %p92, %p93
      %p95 = scmp.ne.s32.totalorder %s87, %s90
      %p96 = scmp.eq.s32.totalorder %s14, 0
      %p97 = por %p95, %p96
      %p98 = scmp.ne.s32.totalorder %s87, %s90
      %p99 = scmp.eq.s32.totalorder %s19, 1
      %p100 = por %p98, %p99
      %p101 = scmp.ne.s32.totalorder %s90, %s91
      %p102 = scmp.eq.s32.totalorder %s19, 0
      %p103 = por %p101, %p102
      %p104 = scmp.ne.s32.totalorder %s90, %s91
      %p105 = scmp.eq.s32.totalorder %s20, 1
      %p106 = por %p104, %p105
      %p108 = scmp.ne.s32.totalorder %s91, %s107
      %p109 = scmp.eq.s32.totalorder %s20, 0
      %p110 = por %p108, %p109
      %s111 = ssub.s32 %s21, %s33
      %s112 = ssub.s32 %s22, %s29
      %s113 = sor.u32 %s111, %s112
      %p114 = scmp.eq.s32.totalorder %s113, 0
      %s116 = sadd.s32 %s115, 1
      %s117 = scalar_select %p114, %s115, %s116
      %p120 = pneg %p114
      %p121 = scmp.eq.s32.totalorder %s14, 1
      %p122 = por %p120, %p121
      %p123 = scmp.ne.s32.totalorder %s115, %s118
      %p124 = scmp.eq.s32.totalorder %s14, 0
      %p125 = por %p123, %p124
      %p126 = scmp.ne.s32.totalorder %s115, %s118
      %p127 = scmp.eq.s32.totalorder %s19, 1
      %p128 = por %p126, %p127
      %p129 = scmp.ne.s32.totalorder %s118, %s119
      %p130 = scmp.eq.s32.totalorder %s19, 0
      %p131 = por %p129, %p130
      %p132 = scmp.ne.s32.totalorder %s118, %s119
      %p133 = scmp.eq.s32.totalorder %s20, 1
      %p134 = por %p132, %p133
      %p136 = scmp.ne.s32.totalorder %s119, %s135
      %p137 = scmp.eq.s32.totalorder %s20, 0
      %p138 = por %p136, %p137
      %p139 = scmp.le.s32.totalorder 1, %s14
      %p140 = scmp.lt.s32.totalorder %s14, 3
      %p141 = pnand %p139, %p140
      %p142 = pneg %p141
      // Predicated region
      $region9: #{tpu_custom_call.1} parent=5 // pred_check
        _
      $region10: #{tpu_custom_call.1} parent=5 // pred_check_branch
        %144 = sbr.rel (%p141) target = $region12
      $region11: #{tpu_custom_call.1} parent=5 // pred_region
        %s145 = ssub.s32 %s14, 1
        // Predicated region
        $region13: #{tpu_custom_call.1} parent=11 // pred_check
          %p146 = pneg %p75
        $region14: #{tpu_custom_call.1} parent=11 // pred_check_branch
          %148 = sbr.rel (%p146) target = $region16
        $region15: #{tpu_custom_call.1} parent=11 // pred_region
          %150 = vsyncadd [#allocation5], 0
          %s151 = sshll.u32 %s1, 4
          %s152 = int_to_ptr.hbm [resolvable:$true] %s151
          %s153 = sshll.u32 [#allocation4], 4
          %s154 = int_to_ptr.vmem [resolvable:$true] %s153
          %159 = dma.hbm_to_vmem [thread:$0]  %s152, 256, %s154, [#allocation5], 64, 64, 4
        $region16: #{tpu_custom_call.1} parent=11 // pred_fallthru
          _
      $region12: #{tpu_custom_call.1} parent=5 // pred_fallthru
        _
      %p160 = scmp.lt.s32.totalorder %s14, 2
      // Predicated region
      $region17: #{tpu_custom_call.1} parent=5 // pred_check
        %p161 = pneg %p160
      $region18: #{tpu_custom_call.1} parent=5 // pred_check_branch
        %163 = sbr.rel (%p161) target = $region20
      $region19: #{tpu_custom_call.1} parent=5 // pred_region
        // Predicated region
        $region21: #{tpu_custom_call.1} parent=19 // pred_check
          %p164 = pneg %p48
        $region22: #{tpu_custom_call.1} parent=19 // pred_check_branch
          %166 = sbr.rel (%p164) target = $region24
        $region23: #{tpu_custom_call.1} parent=19 // pred_region
          %s167 = sand.u32 %s38, 1
          %s168 = scalar_lea.sflag [#allocation3], %s167
          %s169 = sand.u32 %s38, 1
          %s170 = smul.addr %s169, 4
          %s171 = scalar_lea.vmem [#allocation2], %s170
          %173 = vsyncadd %s168, 0
          %s174 = sadd.s32 %s22, %s21
          %s175 = smul.addr %s174, 4
          %s176 = scalar_lea.hbm %s0, %s175
          %s178 = sshll.u32 %s176, 4
          %s179 = int_to_ptr.hbm [resolvable:$true] %s178
          %s180 = sshll.u32 %s171, 4
          %s181 = int_to_ptr.vmem [resolvable:$true] %s180
          %183 = dma.hbm_to_vmem [thread:$0]  %s179, 64, %s181, %s168
        $region24: #{tpu_custom_call.1} parent=19 // pred_fallthru
          _
      $region20: #{tpu_custom_call.1} parent=5 // pred_fallthru
        _
      %p184 = scmp.le.s32.totalorder 1, %s14
      %p185 = scmp.lt.s32.totalorder %s14, 3
      %p186 = pnand %p184, %p185
      %p187 = pneg %p186
      // Predicated region
      $region25: #{tpu_custom_call.1} parent=5 // pred_check
        _
      $region26: #{tpu_custom_call.1} parent=5 // pred_check_branch
        %189 = sbr.rel (%p186) target = $region28
      $region27: #{tpu_custom_call.1} parent=5 // pred_region
        %s190 = ssub.s32 %s14, 1
        %s191 = sand.u32 %s41, 1
        %s192 = scalar_lea.sflag [#allocation3], %s191
        %s193 = sand.u32 %s41, 1
        %s194 = smul.addr %s193, 4
        %s195 = scalar_lea.vmem [#allocation2], %s194
        // Predicated region
        $region29: #{tpu_custom_call.1} parent=27 // pred_check
          %p196 = pneg %p54
        $region30: #{tpu_custom_call.1} parent=27 // pred_check_branch
          %198 = sbr.rel (%p196) target = $region32
        $region31: #{tpu_custom_call.1} parent=27 // pred_region
          %200 = dma.done %s192, 64
        $region32: #{tpu_custom_call.1} parent=27 // pred_fallthru
          _
        // Predicated region
        $region33: #{tpu_custom_call.1} parent=27 // pred_check
          %p201 = pneg %p75
        $region34: #{tpu_custom_call.1} parent=27 // pred_check_branch
          %203 = sbr.rel (%p201) target = $region36
        $region35: #{tpu_custom_call.1} parent=27 // pred_region
          %205 = dma.done [#allocation5], 256
        $region36: #{tpu_custom_call.1} parent=27 // pred_fallthru
          _
        %s206 = sand.u32 %s41, 1
        %s207 = scalar_lea.sflag [#allocation3], %s206
        %s208 = sand.u32 %s41, 1
        %s209 = smul.addr %s208, 4
        %s210 = scalar_lea.vmem [#allocation2], %s209
        %p211 = pneg %p54
        %p212 = pneg %p51
        %p213 = pneg %p75
        %p214 = pneg %p72
        %p215 = pneg %p103
        %p216 = pneg %p100
        %p217 = scmp.lt.s32.totalorder %s23, 1
        %s218 = scalar_select %p217, %s23, 1
        %p219 = scmp.lt.s32.totalorder %s24, 0
        %s220 = scalar_select %p219, %s24, 0
        %s221 = smul.addr %s218, 8
        %s222 = sadd.s32 %s220, %s221
        %s223 = smul.addr %s222, 4
        %s224 = scalar_lea.vmem %s2, %s223
        %p225 = pneg %p131
        %p226 = pneg %p128
        %p227 = scmp.lt.s32.totalorder %s23, 1
        %s228 = scalar_select %p227, %s23, 1
        %p229 = scmp.lt.s32.totalorder %s24, 0
        %s230 = scalar_select %p229, %s24, 0
        %s231 = smul.addr %s228, 8
        %s232 = sadd.s32 %s230, %s231
        %s233 = smul.addr %s232, 4
        %s234 = scalar_lea.vmem %s3, %s233
        %p235 = scmp.lt.s32.totalorder %s23, 1
        %s236 = scalar_select %p235, %s23, 1
        %p237 = scmp.lt.s32.totalorder %s24, 0
        %s238 = scalar_select %p237, %s24, 0
        %s239 = smul.addr %s236, 8
        %s240 = sadd.s32 %s238, %s239
        %s241 = smul.addr %s240, 4
        %s242 = scalar_lea.vmem %s2, %s241
        %p243 = scmp.lt.s32.totalorder %s23, 1
        %s244 = scalar_select %p243, %s23, 1
        %p245 = scmp.lt.s32.totalorder %s24, 0
        %s246 = scalar_select %p245, %s24, 0
        %s247 = smul.addr %s244, 8
        %s248 = sadd.s32 %s246, %s247
        %s249 = smul.addr %s248, 4
        %s250 = scalar_lea.vmem %s3, %s249
        %v253 = vld [vmem:[%s195] sm:$0xf]
        %v254 = vld [vmem:[#allocation4] sm:$0xf]
        %v255 = vld [vmem:[#allocation4 + $0x4] sm:$0xf]
        %v256 = vld [vmem:[#allocation4 + $0x8] sm:$0xf]
        %v257 = vld [vmem:[#allocation4 + $0xc] sm:$0xf]
        %v262 = vunpack.c.l.b16 %v254
        %v263 = vunpack.c.l.b16 %v255
        %v264 = vunpack.c.l.b16 %v256
        %v265 = vunpack.c.l.b16 %v257
        %v266 = vpack.c.b16 %v263, %v262
        %v267 = vpack.c.b16 %v265, %v264
        %vm270 = vcmask 261120
        %v272 = vsel %vm270, %v253, 0
        %274 = vmatpush.bf16.msra.mxu0 0
        %275 = vmatpush.bf16.msra.mxu0 0
        %276 = vmatpush.bf16.msra.mxu0 0
        %277 = vmatpush.bf16.msra.mxu0 0
        %278 = vmatpush.bf16.msra.mxu0 0
        %279 = vmatpush.bf16.msra.mxu0 0
        %280 = vmatpush.bf16.msra.mxu0 %v267
        %281 = vmatpush.bf16.msra.mxu0 %v266
        %282 = vmatmul.bf16.gmra.mxu0 %v272
        %v283 = vpop.f32.mrf.mxu0
        %v284 = vadd.f32 0.0, %v283
        %v285 = vpop.f32.mrf.mxu0
        %286 = vdwg.mxu0
        %v287 = vpack.c.bf16 %v284, %v284
        %vm288 = vcmask 27648
        %289 = vst.msk [vmem:[%s242] sm:$0xf] %vm288, %v287
        %v291 = vunpack.c.l.b16 %v287
        %v292 = vpack.c.b16 %v291, %v291
        %293 = vrot.lane.b32.xlu0 %v292, 96
        %v294 = vpop.permute.xlu0 %293
        %vm295 = vcmask 31744
        %v298 = vsel %vm295, %v294, 1065369472
        %vm300 = vcmask 35840
        %301 = vst.msk [vmem:[%s250] sm:$0xf] %vm300, %v298
        %302 = vrot.lane.b32.xlu0 %v287, 124
        %v303 = vpop.permute.xlu0 %302
        %s305 = scalar_lea.vmem %s242, 4
        %306 = vst.msk [vmem:[%s305] sm:$0xf] %vm288, %v303
        %307 = vrot.lane.b32.xlu0 %v292, 92
        %v308 = vpop.permute.xlu0 %307
        %v310 = vsel %vm295, %v308, 1065369472
        %s312 = scalar_lea.vmem %s250, 4
        %313 = vst.msk [vmem:[%s312] sm:$0xf] %vm300, %v310
        %314 = vrot.lane.b32.xlu0 %v287, 120
        %v315 = vpop.permute.xlu0 %314
        %s317 = scalar_lea.vmem %s242, 8
        %318 = vst.msk [vmem:[%s317] sm:$0xf] %vm288, %v315
        %319 = vrot.lane.b32.xlu0 %v292, 88
        %v320 = vpop.permute.xlu0 %319
        %v322 = vsel %vm295, %v320, 1065369472
        %s324 = scalar_lea.vmem %s250, 8
        %325 = vst.msk [vmem:[%s324] sm:$0xf] %vm300, %v322
        %326 = vrot.lane.b32.xlu0 %v287, 116
        %v327 = vpop.permute.xlu0 %326
        %s329 = scalar_lea.vmem %s242, 12
        %330 = vst.msk [vmem:[%s329] sm:$0xf] %vm288, %v327
        %331 = vrot.lane.b32.xlu0 %v292, 84
        %v332 = vpop.permute.xlu0 %331
        %v334 = vsel %vm295, %v332, 1065369472
        %s336 = scalar_lea.vmem %s250, 12
        %337 = vst.msk [vmem:[%s336] sm:$0xf] %vm300, %v334
        %338 = vrot.lane.b32.xlu0 %v287, 112
        %v339 = vpop.permute.xlu0 %338
        %s341 = scalar_lea.vmem %s242, 16
        %342 = vst.msk [vmem:[%s341] sm:$0xf] %vm288, %v339
        %343 = vrot.lane.b32.xlu0 %v292, 80
        %v344 = vpop.permute.xlu0 %343
        %v346 = vsel %vm295, %v344, 1065369472
        %s348 = scalar_lea.vmem %s250, 16
        %349 = vst.msk [vmem:[%s348] sm:$0xf] %vm300, %v346
        %350 = vrot.lane.b32.xlu0 %v287, 108
        %v351 = vpop.permute.xlu0 %350
        %s353 = scalar_lea.vmem %s242, 20
        %354 = vst.msk [vmem:[%s353] sm:$0xf] %vm288, %v351
        %355 = vrot.lane.b32.xlu0 %v292, 76
        %v356 = vpop.permute.xlu0 %355
        %v358 = vsel %vm295, %v356, 1065369472
        %s360 = scalar_lea.vmem %s250, 20
        %361 = vst.msk [vmem:[%s360] sm:$0xf] %vm300, %v358
        %362 = vrot.lane.b32.xlu0 %v287, 104
        %v363 = vpop.permute.xlu0 %362
        %s365 = scalar_lea.vmem %s242, 24
        %366 = vst.msk [vmem:[%s365] sm:$0xf] %vm288, %v363
        %367 = vrot.lane.b32.xlu0 %v292, 72
        %v368 = vpop.permute.xlu0 %367
        %v370 = vsel %vm295, %v368, 1065369472
        %s372 = scalar_lea.vmem %s250, 24
        %373 = vst.msk [vmem:[%s372] sm:$0xf] %vm300, %v370
        %374 = vrot.lane.b32.xlu0 %v287, 100
        %v375 = vpop.permute.xlu0 %374
        %s377 = scalar_lea.vmem %s242, 28
        %378 = vst.msk [vmem:[%s377] sm:$0xf] %vm288, %v375
        %379 = vrot.lane.b32.xlu0 %v292, 68
        %v380 = vpop.permute.xlu0 %379
        %v382 = vsel %vm295, %v380, 1065369472
        %s384 = scalar_lea.vmem %s250, 28
        %385 = vst.msk [vmem:[%s384] sm:$0xf] %vm300, %v382
        %p386 = scmp.lt.s32.totalorder %s23, 1
        %s387 = scalar_select %p386, %s23, 1
        %p388 = scmp.lt.s32.totalorder %s24, 0
        %s389 = scalar_select %p388, %s24, 0
        %s390 = smul.addr %s387, 8
        %s391 = sadd.s32 %s389, %s390
        %s392 = smul.addr %s391, 4
        %s393 = scalar_lea.vmem %s2, %s392
        %p394 = scmp.lt.s32.totalorder %s23, 1
        %s395 = scalar_select %p394, %s23, 1
        %p396 = scmp.lt.s32.totalorder %s24, 0
        %s397 = scalar_select %p396, %s24, 0
        %s398 = smul.addr %s395, 8
        %s399 = sadd.s32 %s397, %s398
        %s400 = smul.addr %s399, 4
        %s401 = scalar_lea.vmem %s3, %s400
        // Predicated region
        $region37: #{tpu_custom_call.1} parent=27 // pred_check
          %p402 = pneg %p100
        $region38: #{tpu_custom_call.1} parent=27 // pred_check_branch
          %404 = sbr.rel (%p402) target = $region40
        $region39: #{tpu_custom_call.1} parent=27 // pred_region
          _
        $region40: #{tpu_custom_call.1} parent=27 // pred_fallthru
          _
        // Predicated region
        $region41: #{tpu_custom_call.1} parent=27 // pred_check
          %p405 = pneg %p128
        $region42: #{tpu_custom_call.1} parent=27 // pred_check_branch
          %407 = sbr.rel (%p405) target = $region44
        $region43: #{tpu_custom_call.1} parent=27 // pred_region
          _
        $region44: #{tpu_custom_call.1} parent=27 // pred_fallthru
          _
      $region28: #{tpu_custom_call.1} parent=5 // pred_fallthru
        _
      %p408 = scmp.le.s32.totalorder 2, %s14
      // Predicated region
      $region45: #{tpu_custom_call.1} parent=5 // pred_check
        %p409 = pneg %p408
      $region46: #{tpu_custom_call.1} parent=5 // pred_check_branch
        %411 = sbr.rel (%p409) target = $region48
      $region47: #{tpu_custom_call.1} parent=5 // pred_region
        %s412 = ssub.s32 %s14, 2
        // Predicated region
        $region49: #{tpu_custom_call.1} parent=47 // pred_check
          %p413 = pneg %p106
        $region50: #{tpu_custom_call.1} parent=47 // pred_check_branch
          %415 = sbr.rel (%p413) target = $region52
        $region51: #{tpu_custom_call.1} parent=47 // pred_region
          %p416 = scmp.lt.s32.totalorder %s25, 1
          %s417 = scalar_select %p416, %s25, 1
          %p418 = scmp.lt.s32.totalorder %s26, 0
          %s419 = scalar_select %p418, %s26, 0
          %s420 = smul.addr %s417, 8
          %s421 = sadd.s32 %s419, %s420
          %s422 = smul.addr %s421, 4
          %s423 = scalar_lea.vmem %s2, %s422
        $region52: #{tpu_custom_call.1} parent=47 // pred_fallthru
          _
        // Predicated region
        $region53: #{tpu_custom_call.1} parent=47 // pred_check
          %p424 = pneg %p134
        $region54: #{tpu_custom_call.1} parent=47 // pred_check_branch
          %426 = sbr.rel (%p424) target = $region56
        $region55: #{tpu_custom_call.1} parent=47 // pred_region
          %p427 = scmp.lt.s32.totalorder %s25, 1
          %s428 = scalar_select %p427, %s25, 1
          %p429 = scmp.lt.s32.totalorder %s26, 0
          %s430 = scalar_select %p429, %s26, 0
          %s431 = smul.addr %s428, 8
          %s432 = sadd.s32 %s430, %s431
          %s433 = smul.addr %s432, 4
          %s434 = scalar_lea.vmem %s3, %s433
        $region56: #{tpu_custom_call.1} parent=47 // pred_fallthru
          _
      $region48: #{tpu_custom_call.1} parent=5 // pred_fallthru
        _
    $region6: #{tpu_custom_call.1} parent=1 // loop_footer
      %s18 = sadd.s32 1, %s14
    $region7: #{tpu_custom_call.1} parent=1 // loop_footer_branch
      %13 = sbr.rel target = $region3
    $region8: #{tpu_custom_call.1} parent=1 // loop_exit
      _
    %435 = vsyncpa [#allocation3], 1
    %s436 = scalar_lea.sflag [#allocation3], 1
    %437 = vsyncpa %s436, 1
    %438 = vsyncpa [#allocation5], 1

</llo_original>
